<compile_context>
chip_gen: v5e
topology: v5e:2x2
jax: 0.10.0
libtpu: 0.0.40
codegen_flags: <defaults>
</compile_context>

<pallas_src>
from collections import defaultdict

import jax
import jax.numpy as jnp
from jax.experimental import pallas as pl
from jax.experimental.pallas import tpu as pltpu


def _lipshitz_kernel(w_ref, wmats_ref, out_ref):
    """One grid step == one object.

    w_ref     : SMEM (N_obj,) f32   — per-object loss weight `w` (unblocked)
    wmats_ref : VMEM (1, L, H, H) f32 — this object's stacked (padded) weights
    out_ref   : VMEM (1, 1, 128) f32  — w * prod_l ||W_l||_inf, lane-broadcast
    """
    i = pl.program_id(0)
    n_layers = wmats_ref.shape[1]

    # Product over layers of the L-inf operator norm, computed in a single
    # kernel invocation via a static (trace-time) unroll over layers.
    prod = None
    for l in range(n_layers):
        wm = wmats_ref[0, l]                                        # (H, H)
        row_sums = jnp.sum(jnp.abs(wm), axis=-1, keepdims=True)     # (H, 1)
        bound = jnp.max(row_sums, axis=0, keepdims=True)            # (1, 1)
        prod = bound if prod is None else prod * bound

    loss = w_ref[i] * prod                                          # (1, 1)
    # Lane-dense write: broadcast the scalar across the 128-lane row.
    out_ref[...] = jnp.broadcast_to(loss, out_ref.shape).astype(out_ref.dtype)


def color_lipshitz_bound_losses(w_vec: jnp.ndarray,
                                wmats_stacked: jnp.ndarray) -> jnp.ndarray:
    """Batched  w_i * prod_l ||W_{i,l}||_inf  for all objects in one call.

    w_vec         : (N_obj,) f32
    wmats_stacked : (N_obj, L, H, H) f32
    returns       : (N_obj,) f32
    """
    n_obj, n_layers, h, h2 = wmats_stacked.shape
    assert h == h2, "color-net weight stacks must be square-padded"

    # NOTE: the per-object block (1, L, H, H) is tiny (KiB-scale) for typical
    # color MLPs. If L / H ever grow so the block approaches VMEM limits
    # (v7x: 64 MiB physical / 32 MiB scoped default), tile the L axis instead
    # of copying this full-stack block choice.
    out = pl.pallas_call(
        _lipshitz_kernel,
        out_shape=jax.ShapeDtypeStruct((n_obj, 1, 128), jnp.float32),
        grid=(n_obj,),
        in_specs=[
            # per-object loss weights, resident in SMEM for the whole call
            pl.BlockSpec(memory_space=pltpu.MemorySpace.SMEM),
            # one object's full [L, H, H] weight stack per grid step
            pl.BlockSpec((1, n_layers, h, h), lambda i: (i, 0, 0, 0)),
        ],
        out_specs=pl.BlockSpec((1, 1, 128), lambda i: (i, 0, 0)),
        compiler_params=pltpu.CompilerParams(
            dimension_semantics=("parallel",)),     # objects are independent
    )(w_vec.astype(jnp.float32), wmats_stacked.astype(jnp.float32))
    return out[:, 0, 0]


class ColorLipshitzRegLoss:
    """JAX/Pallas re-implementation of the module's forward semantics."""

    def __init__(self, class_name_cfgs, drawable_class_names, enable_after=0):
        self.enable_after = enable_after
        if isinstance(class_name_cfgs, (int, float)):
            class_name_cfgs = {c: {"w": float(class_name_cfgs)}
                               for c in drawable_class_names}
        else:
            class_name_cfgs = {
                k: ({"w": float(v)} if isinstance(v, (int, float)) else dict(v))
                for k, v in class_name_cfgs.items()
            }
        self.class_name_cfgs = class_name_cfgs
        # TODO(synk): `anneal` schedule for w (get_anneal_val) not replicated;
        # constant w is used.

    def forward(self, scene, ret, it: int):
        if it < self.enable_after:
            return {}

        # Collect all objects that contribute a loss term.
        entries = []  # (class_name, w, wmats)
        for _, obj_raw_ret in ret["raw_per_obj_model"].items():
            if obj_raw_ret["volume_buffer"]["type"] == "empty":
                continue
            class_name = obj_raw_ret["class_name"]
            if class_name not in self.class_name_cfgs:
                continue
            model_id = obj_raw_ret["model_id"]
            w = float(self.class_name_cfgs[class_name]["w"])
            wmats = scene["asset_bank"][model_id]["color_net_weights"]
            entries.append((class_name, w, wmats))
        if not entries:
            return {}

        # Batch all objects with identical stack shapes into a single
        # pallas_call (amortizes custom-call dispatch and pipeline warm-up).
        groups = defaultdict(list)
        for e in entries:
            groups[tuple(e[2].shape)].append(e)

        ret_losses = {}
        for _, group in groups.items():
            w_vec = jnp.asarray([g[1] for g in group], jnp.float32)
            wstack = jnp.stack([jnp.asarray(g[2], jnp.float32) for g in group],
                               axis=0)                    # (N_obj, L, H, H)
            losses = color_lipshitz_bound_losses(w_vec, wstack)   # (N_obj,)
            for idx, (class_name, _, _) in enumerate(group):
                # Matches original behavior: same-class entries overwrite.
                ret_losses[f"loss_color_reg.{class_name}"] = losses[idx]
        return ret_losses


def _build_color_net_weights(key, layer_shapes, H):
    """Deterministic color-MLP weights, zero-padded & stacked to [L, H, H]."""
    mats = []
    for (out_f, in_f) in layer_shapes:
        key, sub = jax.random.split(key)
        wm = jax.random.normal(sub, (out_f, in_f), jnp.float32) * 0.1
        padded = jnp.zeros((H, H), jnp.float32).at[:out_f, :in_f].set(wm)
        mats.append(padded)
    return jnp.stack(mats, axis=0)


def _ref_loss(w, wmats):
    bounds = jnp.max(jnp.sum(jnp.abs(wmats), axis=-1), axis=-1)   # (L,)
    return jnp.float32(w) * jnp.prod(bounds)


if __name__ == "__main__":
    key = jax.random.PRNGKey(0)
    H = 32                                            # hidden width
    layer_shapes = [(32, 32), (32, 32), (3, 32)]      # small color MLP (RGB out)
    key, k1, k2 = jax.random.split(key, 3)
    wmats_vehicle = _build_color_net_weights(k1, layer_shapes, H)     # [3,32,32]
    wmats_pedestrian = _build_color_net_weights(k2, layer_shapes, H)  # [3,32,32]

    scene = {"asset_bank": {
        "vehicle#0": {"color_net_weights": wmats_vehicle},
        "pedestrian#0": {"color_net_weights": wmats_pedestrian},
    }}
    ret = {
        "raw_per_obj_model": {
            "obj0": {"volume_buffer": {"type": "packed"},
                     "class_name": "Vehicle", "model_id": "vehicle#0"},
            "obj1": {  # skipped: empty volume buffer
                "volume_buffer": {"type": "empty"},
                "class_name": "Vehicle", "model_id": "vehicle#0"},
            "obj2": {"volume_buffer": {"type": "packed"},
                     "class_name": "Pedestrian", "model_id": "pedestrian#0"},
            "obj3": {  # skipped: class not configured
                "volume_buffer": {"type": "packed"},
                "class_name": "Sky", "model_id": "sky#0"},
        }
    }

    loss_mod = ColorLipshitzRegLoss(
        class_name_cfgs={"Vehicle": 0.03, "Pedestrian": {"w": 0.01}},
        drawable_class_names=["Vehicle", "Pedestrian"],
        enable_after=0,
    )

    # Gating path: disabled iteration returns no losses.
    gated = ColorLipshitzRegLoss({"Vehicle": 0.03}, ["Vehicle"],
                                 enable_after=1000)
    assert gated.forward(scene, ret, it=5) == {}

    losses = loss_mod.forward(scene, ret, it=100)
    jax.block_until_ready(losses)

    exp_v = _ref_loss(0.03, wmats_vehicle)
    exp_p = _ref_loss(0.01, wmats_pedestrian)
    out_v = losses["loss_color_reg.Vehicle"]
    out_p = losses["loss_color_reg.Pedestrian"]
    assert jnp.allclose(out_v, exp_v, rtol=1e-5, atol=1e-6), (out_v, exp_v)
    assert jnp.allclose(out_p, exp_p, rtol=1e-5, atol=1e-6), (out_p, exp_p)

    print("KERNEL_OK")
</pallas_src>

<mosaic_0001>
module attributes {stable_mosaic.version = 11 : i64} {
  func.func @_lipshitz_kernel(%arg0: i32, %arg1: memref<2xf32, #tpu.memory_space<smem>>, %arg2: memref<1x3x32x32xf32, #tpu.memory_space<vmem>>, %arg3: memref<1x1x128xf32, #tpu.memory_space<vmem>>) attributes {dimension_semantics = [#tpu.dimension_semantics<parallel>], iteration_bounds = array<i64: 2>, scalar_prefetch = 0 : i64, scratch_operands = 0 : i64, tpu.core_type = #tpu.core_type<tc>, window_params = [{transform_indices = @transform_0, window_bounds = array<i64: 2>}, {transform_indices = @transform_1, window_bounds = array<i64: 1, 3, 32, 32>}, {transform_indices = @transform_2, window_bounds = array<i64: 1, 1, 128>}]} {
    %c0 = arith.constant 0 : index
    %c0_0 = arith.constant 0 : index
    %c0_1 = arith.constant 0 : index
    %c0_2 = arith.constant 0 : index
    %0 = vector.load %arg2[%c0, %c0_0, %c0_1, %c0_2] : memref<1x3x32x32xf32, #tpu.memory_space<vmem>>, vector<1x1x32x32xf32>
    %1 = vector.shape_cast %0 : vector<1x1x32x32xf32> to vector<32x32xf32>
    %2 = math.absf %1 : vector<32x32xf32>
    %cst = arith.constant dense<0.000000e+00> : vector<32xf32>
    %3 = vector.multi_reduction <add>, %2, %cst [1] : vector<32x32xf32> to vector<32xf32>
    %4 = vector.shape_cast %3 : vector<32xf32> to vector<32x1xf32>
    %cst_3 = arith.constant dense<0xFF800000> : vector<1xf32>
    %5 = vector.multi_reduction <maximumf>, %4, %cst_3 [0] : vector<32x1xf32> to vector<1xf32>
    %6 = vector.shape_cast %5 : vector<1xf32> to vector<1x1xf32>
    %c0_4 = arith.constant 0 : index
    %c1 = arith.constant 1 : index
    %c0_5 = arith.constant 0 : index
    %c0_6 = arith.constant 0 : index
    %7 = vector.load %arg2[%c0_4, %c1, %c0_5, %c0_6] : memref<1x3x32x32xf32, #tpu.memory_space<vmem>>, vector<1x1x32x32xf32>
    %8 = vector.shape_cast %7 : vector<1x1x32x32xf32> to vector<32x32xf32>
    %9 = math.absf %8 : vector<32x32xf32>
    %cst_7 = arith.constant dense<0.000000e+00> : vector<32xf32>
    %10 = vector.multi_reduction <add>, %9, %cst_7 [1] : vector<32x32xf32> to vector<32xf32>
    %11 = vector.shape_cast %10 : vector<32xf32> to vector<32x1xf32>
    %cst_8 = arith.constant dense<0xFF800000> : vector<1xf32>
    %12 = vector.multi_reduction <maximumf>, %11, %cst_8 [0] : vector<32x1xf32> to vector<1xf32>
    %13 = vector.shape_cast %12 : vector<1xf32> to vector<1x1xf32>
    %14 = arith.mulf %6, %13 : vector<1x1xf32>
    %c0_9 = arith.constant 0 : index
    %c2 = arith.constant 2 : index
    %c0_10 = arith.constant 0 : index
    %c0_11 = arith.constant 0 : index
    %15 = vector.load %arg2[%c0_9, %c2, %c0_10, %c0_11] : memref<1x3x32x32xf32, #tpu.memory_space<vmem>>, vector<1x1x32x32xf32>
    %16 = vector.shape_cast %15 : vector<1x1x32x32xf32> to vector<32x32xf32>
    %17 = math.absf %16 : vector<32x32xf32>
    %cst_12 = arith.constant dense<0.000000e+00> : vector<32xf32>
    %18 = vector.multi_reduction <add>, %17, %cst_12 [1] : vector<32x32xf32> to vector<32xf32>
    %19 = vector.shape_cast %18 : vector<32xf32> to vector<32x1xf32>
    %cst_13 = arith.constant dense<0xFF800000> : vector<1xf32>
    %20 = vector.multi_reduction <maximumf>, %19, %cst_13 [0] : vector<32x1xf32> to vector<1xf32>
    %21 = vector.shape_cast %20 : vector<1xf32> to vector<1x1xf32>
    %22 = arith.mulf %14, %21 : vector<1x1xf32>
    %23 = arith.index_cast %arg0 : i32 to index
    %24 = memref.load %arg1[%23] : memref<2xf32, #tpu.memory_space<smem>>
    %25 = vector.broadcast %24 : f32 to vector<1x1xf32>
    %26 = arith.mulf %25, %22 : vector<1x1xf32>
    %27 = vector.shape_cast %26 : vector<1x1xf32> to vector<1x1x1xf32>
    %28 = vector.broadcast %27 : vector<1x1x1xf32> to vector<1x1x128xf32>
    %c0_14 = arith.constant 0 : index
    %c0_15 = arith.constant 0 : index
    %c0_16 = arith.constant 0 : index
    %29 = vector.load %arg3[%c0_14, %c0_15, %c0_16] : memref<1x1x128xf32, #tpu.memory_space<vmem>>, vector<1x1x128xf32>
    tpu.vector_store %arg3[%c0_14, %c0_15, %c0_16], %28 {strides = array<i32>} : memref<1x1x128xf32, #tpu.memory_space<vmem>>, vector<1x1x128xf32>,
    return
  }
  func.func @transform_0(%arg0: i32) -> i32 {
    %c0_i32 = arith.constant 0 : i32
    %c0_i32_0 = arith.constant 0 : i32
    return %c0_i32 : i32
  }
  func.func @transform_1(%arg0: i32) -> (i32, i32, i32, i32) {
    %c0_i32 = arith.constant 0 : i32
    %c0_i32_0 = arith.constant 0 : i32
    %c0_i32_1 = arith.constant 0 : i32
    %c0_i32_2 = arith.constant 0 : i32
    return %arg0, %c0_i32, %c0_i32_0, %c0_i32_1 : i32, i32, i32, i32
  }
  func.func @transform_2(%arg0: i32) -> (i32, i32, i32) {
    %c0_i32 = arith.constant 0 : i32
    %c0_i32_0 = arith.constant 0 : i32
    %c0_i32_1 = arith.constant 0 : i32
    return %arg0, %c0_i32, %c0_i32_0 : i32, i32, i32
  }
}

</mosaic_0001>

<llo_original>
// kernel: tpu_custom_call.1
$region0: #{tpu_custom_call.1}
  #allocation0 [shape = 'u32[]', space=smem, size = 0x4, offset = 0x4, fixed_abs, tag = 'smem constant byte address 0x4 - core index']
  #allocation1 [shape = 'u32[72,128]{1,0:T(1,128)}', space=vmem, size = 0x9000, scoped, tag = 'internal scratch']
  %s0 = inlined_call_operand.hbm [shape: f32[2], index: 0, kind: input, shape index: {}]
  %s1 = inlined_call_operand.hbm [shape: f32[2,3,32,32], index: 1, kind: input, shape index: {}]
  %s2 = inlined_call_operand.hbm [shape: f32[2,1,128], index: 2, kind: output, shape index: {}]
  %s3 = sld [smem:[#allocation0]]
  $region49: #{tpu_custom_call.1} parent=0
    _
  %s5 = ssub.s32 1, %s3
  %s6 = scalar_select 0, %s5, %s3
  $region1: #{tpu_custom_call.1} parent=0
    #allocation2 [shape = 'u8[512]{0}', space=smem, size = 0x200, scoped, tag = 'input window, operand 0, single buffered']
    #allocation3 [shape = 's32[2]{0}', space=sflag, size = 0x8, scoped, tag = 'scoped memory for tpu_custom_call.1']
    #allocation4 [shape = 's32[2]{0}', space=sflag, size = 0x8, scoped, tag = 'scoped memory for tpu_custom_call.1']
    #allocation5 [shape = 's32[2]{0}', space=sflag, size = 0x8, scoped, tag = 'scoped memory for tpu_custom_call.1']
    #allocation6 [shape = 'u8[98304]{0}', space=vmem, size = 0x18000, scoped, tag = 'input window, operand 1']
    #allocation7 [shape = 'u8[1024]{0}', space=vmem, size = 0x400, scoped, tag = 'output window, operand 0']
    %7 = vsyncpa [#allocation5], 0
    %8 = vsyncpa [#allocation3], 0
    %s9 = scalar_lea.sflag [#allocation3], 1
    %10 = vsyncpa %s9, 0
    %11 = vsyncpa [#allocation4], 0
    %s12 = scalar_lea.sflag [#allocation4], 1
    %13 = vsyncpa %s12, 0
    loop: start=0, step=1, limit=4
    $region2: #{tpu_custom_call.1} parent=1 // loop_pre_header
      _
    $region3: #{tpu_custom_call.1} parent=1 // loop_header
      %s15 = sphi 0, %s19
      %p16 = scmp.ge.s32.totalorder %s15, 4
      %s23 = sphi 0, %s23
      %s25 = sphi 0, %s23
      %s26 = sphi 0, %s25
      %s40 = sphi 0, %s26
      %s46 = sphi 0, %s48
      %s49 = sphi 0, %s46
      %s50 = sphi 0, %s49
      %s66 = sphi 0, %s50
      %s72 = sphi 0, %s74
      %s75 = sphi 0, %s72
      %s76 = sphi 0, %s75
      %s92 = sphi 0, %s76
    $region4: #{tpu_custom_call.1} parent=1 // loop_header_branch
      %18 = sbr.rel (%p16) target = $region8
    $region5: #{tpu_custom_call.1} parent=1 // loop_body
      %s20 = ssub.s32 %s15, 1
      %s21 = ssub.s32 %s15, 2
      %s22 = sadd.s32 %s15, 1
      %s24 = sadd.s32 %s23, 1
      %p27 = scmp.eq.s32.totalorder %s15, 1
      %p28 = scmp.ne.s32.totalorder %s23, %s25
      %p29 = scmp.eq.s32.totalorder %s15, 0
      %p30 = por %p28, %p29
      %p31 = scmp.ne.s32.totalorder %s23, %s25
      %p32 = scmp.eq.s32.totalorder %s20, 1
      %p33 = por %p31, %p32
      %p34 = scmp.ne.s32.totalorder %s25, %s26
      %p35 = scmp.eq.s32.totalorder %s20, 0
      %p36 = por %p34, %p35
      %p37 = scmp.ne.s32.totalorder %s25, %s26
      %p38 = scmp.eq.s32.totalorder %s21, 1
      %p39 = por %p37, %p38
      %p41 = scmp.ne.s32.totalorder %s26, %s40
      %p42 = scmp.eq.s32.totalorder %s21, 0
      %p43 = por %p41, %p42
      %s44 = ssub.s32 %s15, %s22
      %p45 = scmp.eq.s32.totalorder %s44, 0
      %s47 = sadd.s32 %s46, 1
      %s48 = scalar_select %p45, %s46, %s47
      %p51 = pneg %p45
      %p52 = scmp.eq.s32.totalorder %s15, 1
      %p53 = por %p51, %p52
      %p54 = scmp.ne.s32.totalorder %s46, %s49
      %p55 = scmp.eq.s32.totalorder %s15, 0
      %p56 = por %p54, %p55
      %p57 = scmp.ne.s32.totalorder %s46, %s49
      %p58 = scmp.eq.s32.totalorder %s20, 1
      %p59 = por %p57, %p58
      %p60 = scmp.ne.s32.totalorder %s49, %s50
      %p61 = scmp.eq.s32.totalorder %s20, 0
      %p62 = por %p60, %p61
      %p63 = scmp.ne.s32.totalorder %s49, %s50
      %p64 = scmp.eq.s32.totalorder %s21, 1
      %p65 = por %p63, %p64
      %p67 = scmp.ne.s32.totalorder %s50, %s66
      %p68 = scmp.eq.s32.totalorder %s21, 0
      %p69 = por %p67, %p68
      %s70 = ssub.s32 %s15, %s22
      %p71 = scmp.eq.s32.totalorder %s70, 0
      %s73 = sadd.s32 %s72, 1
      %s74 = scalar_select %p71, %s72, %s73
      %p77 = pneg %p71
      %p78 = scmp.eq.s32.totalorder %s15, 1
      %p79 = por %p77, %p78
      %p80 = scmp.ne.s32.totalorder %s72, %s75
      %p81 = scmp.eq.s32.totalorder %s15, 0
      %p82 = por %p80, %p81
      %p83 = scmp.ne.s32.totalorder %s72, %s75
      %p84 = scmp.eq.s32.totalorder %s20, 1
      %p85 = por %p83, %p84
      %p86 = scmp.ne.s32.totalorder %s75, %s76
      %p87 = scmp.eq.s32.totalorder %s20, 0
      %p88 = por %p86, %p87
      %p89 = scmp.ne.s32.totalorder %s75, %s76
      %p90 = scmp.eq.s32.totalorder %s21, 1
      %p91 = por %p89, %p90
      %p93 = scmp.ne.s32.totalorder %s76, %s92
      %p94 = scmp.eq.s32.totalorder %s21, 0
      %p95 = por %p93, %p94
      %p96 = scmp.le.s32.totalorder 1, %s15
      %p97 = scmp.lt.s32.totalorder %s15, 3
      %p98 = pnand %p96, %p97
      %p99 = pneg %p98
      // Predicated region
      $region9: #{tpu_custom_call.1} parent=5 // pred_check
        _
      $region10: #{tpu_custom_call.1} parent=5 // pred_check_branch
        %101 = sbr.rel (%p98) target = $region12
      $region11: #{tpu_custom_call.1} parent=5 // pred_region
        %s102 = ssub.s32 %s15, 1
        // Predicated region
        $region13: #{tpu_custom_call.1} parent=11 // pred_check
          %p103 = pneg %p36
        $region14: #{tpu_custom_call.1} parent=11 // pred_check_branch
          %105 = sbr.rel (%p103) target = $region16
        $region15: #{tpu_custom_call.1} parent=11 // pred_region
          %107 = vsyncadd [#allocation5], 0
          %s109 = sshll.u32 %s0, 4
          %s110 = int_to_ptr.hbm [resolvable:$true] %s109
          %112 = dma.hbm_to_smem %s110, 16, [#allocation2], [#allocation5]
        $region16: #{tpu_custom_call.1} parent=11 // pred_fallthru
          _
      $region12: #{tpu_custom_call.1} parent=5 // pred_fallthru
        _
      %p113 = scmp.lt.s32.totalorder %s15, 2
      // Predicated region
      $region17: #{tpu_custom_call.1} parent=5 // pred_check
        %p114 = pneg %p113
      $region18: #{tpu_custom_call.1} parent=5 // pred_check_branch
        %116 = sbr.rel (%p114) target = $region20
      $region19: #{tpu_custom_call.1} parent=5 // pred_region
        // Predicated region
        $region21: #{tpu_custom_call.1} parent=19 // pred_check
          %p117 = pneg %p56
        $region22: #{tpu_custom_call.1} parent=19 // pred_check_branch
          %119 = sbr.rel (%p117) target = $region24
        $region23: #{tpu_custom_call.1} parent=19 // pred_region
          %s120 = sand.u32 %s46, 1
          %s121 = scalar_lea.sflag [#allocation3], %s120
          %s122 = sand.u32 %s46, 1
          %s123 = smul.addr %s122, 96
          %s124 = scalar_lea.vmem [#allocation6], %s123
          %126 = vsyncadd %s121, 0
          %s127 = smul.addr %s15, 12
          %s128 = smul.addr %s127, 8
          %s129 = scalar_lea.hbm %s1, %s128
          %s130 = sshll.u32 %s129, 4
          %s131 = int_to_ptr.hbm [resolvable:$true] %s130
          %s132 = sshll.u32 %s124, 4
          %s133 = int_to_ptr.vmem [resolvable:$true] %s132
          %138 = dma.hbm_to_vmem [thread:$0]  %s131, 1536, %s133, %s121, 128, 128, 8
        $region24: #{tpu_custom_call.1} parent=19 // pred_fallthru
          _
      $region20: #{tpu_custom_call.1} parent=5 // pred_fallthru
        _
      %p139 = scmp.le.s32.totalorder 1, %s15
      %p140 = scmp.lt.s32.totalorder %s15, 3
      %p141 = pnand %p139, %p140
      %p142 = pneg %p141
      // Predicated region
      $region25: #{tpu_custom_call.1} parent=5 // pred_check
        _
      $region26: #{tpu_custom_call.1} parent=5 // pred_check_branch
        %144 = sbr.rel (%p141) target = $region28
      $region27: #{tpu_custom_call.1} parent=5 // pred_region
        %s145 = ssub.s32 %s15, 1
        // Predicated region
        $region29: #{tpu_custom_call.1} parent=27 // pred_check
          %p146 = pneg %p36
        $region30: #{tpu_custom_call.1} parent=27 // pred_check_branch
          %148 = sbr.rel (%p146) target = $region32
        $region31: #{tpu_custom_call.1} parent=27 // pred_region
          %150 = dma.done [#allocation5], 16
        $region32: #{tpu_custom_call.1} parent=27 // pred_fallthru
          _
        %s151 = sand.u32 %s49, 1
        %s152 = scalar_lea.sflag [#allocation3], %s151
        %s153 = sand.u32 %s49, 1
        %s154 = smul.addr %s153, 96
        %s155 = scalar_lea.vmem [#allocation6], %s154
        // Predicated region
        $region33: #{tpu_custom_call.1} parent=27 // pred_check
          %p156 = pneg %p62
        $region34: #{tpu_custom_call.1} parent=27 // pred_check_branch
          %158 = sbr.rel (%p156) target = $region36
        $region35: #{tpu_custom_call.1} parent=27 // pred_region
          %160 = dma.done %s152, 1536
        $region36: #{tpu_custom_call.1} parent=27 // pred_fallthru
          _
        %161 = sfence
        %p162 = pneg %p36
        %p163 = pneg %p33
        %s164 = sand.u32 %s49, 1
        %s165 = scalar_lea.sflag [#allocation3], %s164
        %s166 = sand.u32 %s49, 1
        %s167 = smul.addr %s166, 96
        %s168 = scalar_lea.vmem [#allocation6], %s167
        %p169 = pneg %p62
        %p170 = pneg %p59
        %p171 = pneg %p88
        %p172 = pneg %p85
        %s173 = sand.u32 %s75, 1
        %s174 = scalar_lea.sflag [#allocation4], %s173
        %s175 = sand.u32 %s75, 1
        %s176 = scalar_lea.vmem [#allocation7], %s175
        %v177 = vld [vmem:[%s155] sm:$0xff]
        %v178 = vld [vmem:[%s155 + $0x8] sm:$0xff]
        %v179 = vld [vmem:[%s155 + $0x10] sm:$0xff]
        %v180 = vld [vmem:[%s155 + $0x18] sm:$0xff]
        %v181 = vand.u32 2147483647, %v177
        %v182 = vand.u32 2147483647, %v178
        %v183 = vand.u32 2147483647, %v179
        %v184 = vand.u32 2147483647, %v180
        %vm185 = vcmask 261120
        %v186 = vsel %vm185, %v181, 0.0
        %187 = vadd.xlane.f32.xlu0 %v186
        %v188 = vpop.xlane.xlu0 %187
        %v189 = vsel %vm185, %v182, 0.0
        %190 = vadd.xlane.f32.xlu0 %v189
        %v191 = vpop.xlane.xlu0 %190
        %v192 = vsel %vm185, %v183, 0.0
        %193 = vadd.xlane.f32.xlu0 %v192
        %v194 = vpop.xlane.xlu0 %193
        %v195 = vsel %vm185, %v184, 0.0
        %196 = vadd.xlane.f32.xlu0 %v195
        %v197 = vpop.xlane.xlu0 %196
        %v198 = vmax.f32 %v188, %v191
        %v199 = vmax.f32 %v194, %v197
        %v200 = vmax.f32 %v198, %v199
        %v201 = vrot.slane %v200, 4
        %v202 = vmax.f32 %v200, %v201
        %v203 = vrot.slane %v202, 2
        %v204 = vmax.f32 %v202, %v203
        %v205 = vrot.slane %v204, 1
        %v206 = vmax.f32 %v204, %v205
        %s207 = scalar_lea.vmem %s155, 32 [#allocation6]
        %v208 = vld [vmem:[%s207] sm:$0xff]
        %v209 = vld [vmem:[%s207 + $0x8] sm:$0xff]
        %v210 = vld [vmem:[%s207 + $0x10] sm:$0xff]
        %v211 = vld [vmem:[%s207 + $0x18] sm:$0xff]
        %v212 = vand.u32 2147483647, %v208
        %v213 = vand.u32 2147483647, %v209
        %v214 = vand.u32 2147483647, %v210
        %v215 = vand.u32 2147483647, %v211
        %v216 = vsel %vm185, %v212, 0.0
        %217 = vadd.xlane.f32.xlu0 %v216
        %v218 = vpop.xlane.xlu0 %217
        %v219 = vsel %vm185, %v213, 0.0
        %220 = vadd.xlane.f32.xlu0 %v219
        %v221 = vpop.xlane.xlu0 %220
        %v222 = vsel %vm185, %v214, 0.0
        %223 = vadd.xlane.f32.xlu0 %v222
        %v224 = vpop.xlane.xlu0 %223
        %v225 = vsel %vm185, %v215, 0.0
        %226 = vadd.xlane.f32.xlu0 %v225
        %v227 = vpop.xlane.xlu0 %226
        %v228 = vmax.f32 %v218, %v221
        %v229 = vmax.f32 %v224, %v227
        %v230 = vmax.f32 %v228, %v229
        %v231 = vrot.slane %v230, 4
        %v232 = vmax.f32 %v230, %v231
        %v233 = vrot.slane %v232, 2
        %v234 = vmax.f32 %v232, %v233
        %v235 = vrot.slane %v234, 1
        %v236 = vmax.f32 %v234, %v235
        %v237 = vmul.f32 %v206, %v236
        %s238 = scalar_lea.vmem %s155, 64 [#allocation6]
        %v239 = vld [vmem:[%s238] sm:$0xff]
        %v240 = vld [vmem:[%s238 + $0x8] sm:$0xff]
        %v241 = vld [vmem:[%s238 + $0x10] sm:$0xff]
        %v242 = vld [vmem:[%s238 + $0x18] sm:$0xff]
        %v243 = vand.u32 2147483647, %v239
        %v244 = vand.u32 2147483647, %v240
        %v245 = vand.u32 2147483647, %v241
        %v246 = vand.u32 2147483647, %v242
        %v247 = vsel %vm185, %v243, 0.0
        %248 = vadd.xlane.f32.xlu0 %v247
        %v249 = vpop.xlane.xlu0 %248
        %v250 = vsel %vm185, %v244, 0.0
        %251 = vadd.xlane.f32.xlu0 %v250
        %v252 = vpop.xlane.xlu0 %251
        %v253 = vsel %vm185, %v245, 0.0
        %254 = vadd.xlane.f32.xlu0 %v253
        %v255 = vpop.xlane.xlu0 %254
        %v256 = vsel %vm185, %v246, 0.0
        %257 = vadd.xlane.f32.xlu0 %v256
        %v258 = vpop.xlane.xlu0 %257
        %v259 = vmax.f32 %v249, %v252
        %v260 = vmax.f32 %v255, %v258
        %v261 = vmax.f32 %v259, %v260
        %v262 = vrot.slane %v261, 4
        %v263 = vmax.f32 %v261, %v262
        %v264 = vrot.slane %v263, 2
        %v265 = vmax.f32 %v263, %v264
        %v266 = vrot.slane %v265, 1
        %v267 = vmax.f32 %v265, %v266
        %v268 = vmul.f32 %v237, %v267
        %s269 = sld [smem:[#allocation2 + %s20]]
        %v270 = vstv %s269
        %v271 = vmul.f32 %v270, %v268
        %272 = vst [vmem:[%s176] sm:$0x1] %v271
        %s273 = sand.u32 %s75, 1
        %s274 = scalar_lea.sflag [#allocation4], %s273
        %s275 = sand.u32 %s75, 1
        %s276 = scalar_lea.vmem [#allocation7], %s275
        // Predicated region
        $region37: #{tpu_custom_call.1} parent=27 // pred_check
          %p277 = pneg %p85
        $region38: #{tpu_custom_call.1} parent=27 // pred_check_branch
          %279 = sbr.rel (%p277) target = $region40
        $region39: #{tpu_custom_call.1} parent=27 // pred_region
          %281 = vsyncadd %s274, 0
          %s282 = scalar_lea.hbm %s2, %s20
          %s284 = sshll.u32 %s276, 4
          %s285 = int_to_ptr.vmem [resolvable:$true] %s284
          %s286 = sshll.u32 %s282, 4
          %s287 = int_to_ptr.hbm [resolvable:$true] %s286
          %289 = dma.vmem_to_hbm [thread:$0]  %s285, 16, %s287, %s274
        $region40: #{tpu_custom_call.1} parent=27 // pred_fallthru
          _
      $region28: #{tpu_custom_call.1} parent=5 // pred_fallthru
        _
      %p290 = scmp.le.s32.totalorder 2, %s15
      // Predicated region
      $region41: #{tpu_custom_call.1} parent=5 // pred_check
        %p291 = pneg %p290
      $region42: #{tpu_custom_call.1} parent=5 // pred_check_branch
        %293 = sbr.rel (%p291) target = $region44
      $region43: #{tpu_custom_call.1} parent=5 // pred_region
        %s294 = ssub.s32 %s15, 2
        // Predicated region
        $region45: #{tpu_custom_call.1} parent=43 // pred_check
          %p295 = pneg %p91
        $region46: #{tpu_custom_call.1} parent=43 // pred_check_branch
          %297 = sbr.rel (%p295) target = $region48
        $region47: #{tpu_custom_call.1} parent=43 // pred_region
          %s298 = sand.u32 %s76, 1
          %s299 = scalar_lea.sflag [#allocation4], %s298
          %s300 = sand.u32 %s76, 1
          %s301 = scalar_lea.vmem [#allocation7], %s300
          %303 = dma.done %s299, 16
        $region48: #{tpu_custom_call.1} parent=43 // pred_fallthru
          _
      $region44: #{tpu_custom_call.1} parent=5 // pred_fallthru
        _
    $region6: #{tpu_custom_call.1} parent=1 // loop_footer
      %s19 = sadd.s32 1, %s15
    $region7: #{tpu_custom_call.1} parent=1 // loop_footer_branch
      %14 = sbr.rel target = $region3
    $region8: #{tpu_custom_call.1} parent=1 // loop_exit
      _
    %304 = vsyncpa [#allocation3], 1
    %s305 = scalar_lea.sflag [#allocation3], 1
    %306 = vsyncpa %s305, 1
    %307 = vsyncpa [#allocation4], 1
    %s308 = scalar_lea.sflag [#allocation4], 1
    %309 = vsyncpa %s308, 1
    %310 = vsyncpa [#allocation5], 1
    %s311 = scalar_lea.sflag [#allocation5], 1
    %312 = vsyncpa %s311, 1

</llo_original>
